<compile_context>
chip_gen: v6e
topology: v6e:2x2x1
jax: 0.10.0
libtpu: 0.0.40
codegen_flags: <defaults>
</compile_context>

<pallas_src>
import jax
import jax.numpy as jnp
from jax.experimental import pallas as pl
from jax.experimental.pallas import tpu as pltpu


def rnn_wavefront_kernel(x_ref, w_ih0_ref, b0_ref, w_blk_ref, b1_ref,
                         w_fc_ref, b_fc_ref, out_ref):
    """Whole-model kernel: wavefronted 2-layer tanh RNN, last step -> FC -> sigmoid.

    x_ref:   (B, T, I) f32, batch-first (native PyTorch layout)
    w_ih0:   (I, H)    f32   (= weight_ih_l0.T)
    b0:      (1, H)    f32   (= b_ih_l0 + b_hh_l0)
    w_blk:   (2H, 2H)  bf16  [[w_hh0.T-packed blocks]] = [[w_hh0, w_ih1],[0, w_hh1]]
    b1:      (1, H)    f32   (= b_ih_l1 + b_hh_l1)
    w_fc:    (1, H)    f32   (= fc.weight)
    b_fc:    (1, 1)    f32
    out:     (B, 1)    f32
    """
    B, T, I = x_ref.shape
    H2 = w_blk_ref.shape[0]
    H = H2 // 2

    w_blk = w_blk_ref[...]                               # (2H, 2H) bf16
    b0 = b0_ref[...]                                     # (1, H) f32
    b1 = b1_ref[...]                                     # (1, H) f32

    # Hoisted layer-0 input projection (+ bias) for ALL timesteps: one dense
    # pass off the serial chain, in native (B, T, H) layout (no transpose).
    if I == 1:
        in_proj = x_ref[...] * w_ih0_ref[...] + b0       # (B, T, H)
    else:
        xf = x_ref[...].reshape(B * T, I)
        in_proj = (jnp.dot(xf, w_ih0_ref[...],
                           preferred_element_type=jnp.float32)
                   + b0).reshape(B, T, H)

    # Additive slab for the wavefront state [h0_t | h1_{t-1}]:
    #   left  half: x_t @ w_ih0 + b0   (drives layer 0)
    #   right half: b1                 (drives layer 1)
    add_all = jnp.concatenate(
        [in_proj, jnp.broadcast_to(b1, (B, T, H))], axis=-1)      # (B, T, 2H)

    # t = 0 peeled: h0_{-1} = h1_{-1} = 0, so the layer-1 half starts at
    # exactly zero and the recurrent matmul vanishes.
    s = jnp.concatenate(
        [jnp.tanh(in_proj[:, 0, :]), jnp.zeros((B, H), jnp.float32)],
        axis=-1)                                                   # (B, 2H)

    # Wavefront recurrence (fully unrolled; T is small and static).
    #   s_t = tanh([x_t@w_ih0+b0 | b1] + s_{t-1} @ [[w_hh0, w_ih1],[0, w_hh1]])
    #       = [h0_t | h1_{t-1}]
    # -> one 128x128 bf16 MXU matmul + one full-vreg tanh per step.
    for t in range(1, T):
        hh = jnp.dot(s.astype(jnp.bfloat16), w_blk,
                     preferred_element_type=jnp.float32)           # (B, 2H)
        s = jnp.tanh(add_all[:, t, :] + hh)

    # Epilogue (the "+1" wavefront step): produce h1_{T-1} from [h0_{T-1} | h1_{T-2}].
    hh = jnp.dot(s.astype(jnp.bfloat16), w_blk,
                 preferred_element_type=jnp.float32)               # (B, 2H)
    h1_last = jnp.tanh(hh[:, H:] + b1)                             # (B, H)

    # Linear(H, 1) as VPU multiply + lane reduction (cheaper than N=1 MXU matmul),
    # then sigmoid.
    logits = jnp.sum(h1_last * w_fc_ref[...], axis=-1, keepdims=True) + b_fc_ref[...]
    out_ref[...] = jax.nn.sigmoid(logits)


def pack_kernel_params(params):
    """One-time packing of PyTorch-shaped params into kernel layout."""
    H = params["w_hh0"].shape[0]
    # Wavefront weight so that [h0_t | h1_{t-1}] @ W
    #   = [h0_t @ w_hh0 | h0_t @ w_ih1 + h1_{t-1} @ w_hh1].
    w_blk = jnp.concatenate(
        [jnp.concatenate([params["w_hh0"], params["w_ih1"]], axis=1),
         jnp.concatenate([jnp.zeros((H, H), jnp.float32), params["w_hh1"]], axis=1)],
        axis=0).astype(jnp.bfloat16)                                # (2H, 2H) bf16
    return dict(
        w_ih0=params["w_ih0"],                   # (I, H) f32
        b0=params["b0"],                         # (1, H) f32
        w_blk=w_blk,                             # (2H, 2H) bf16
        b1=params["b1"],                         # (1, H) f32
        w_fc_row=params["w_fc"].reshape(1, -1),  # (1, H) f32 row for VPU reduce
        b_fc=params["b_fc"],                     # (1, 1) f32
    )


def simple_rnn_model(x, kparams):
    """x: (B, T, I) f32 (PyTorch batch_first layout). Returns (B, 1) sigmoid output."""
    B, T, I = x.shape
    # Whole-array VMEM residency: total footprint ~65 KiB, far under the scoped
    # VMEM limit on every generation (v5e/v6e/v7x) -> no grid, no pipelining.
    # For large batched serving, add a parallel grid over B tiles
    # (dimension_semantics=("parallel",)) to engage v7x's second TensorCore.
    vmem = pl.BlockSpec(memory_space=pltpu.MemorySpace.VMEM)
    return pl.pallas_call(
        rnn_wavefront_kernel,
        out_shape=jax.ShapeDtypeStruct((B, 1), jnp.float32),
        in_specs=[vmem] * 7,
        out_specs=vmem,
    )(
        x,
        kparams["w_ih0"], kparams["b0"],
        kparams["w_blk"], kparams["b1"],
        kparams["w_fc_row"], kparams["b_fc"],
    )


def make_params(key, input_size=1, hidden_size=64):
    """Deterministic params matching the PyTorch module's shapes.

    PyTorch stores weight_ih_l0 (H, I), weight_hh_l* (H, H), fc.weight (1, H);
    here they are stored pre-transposed for row-major matmuls.
    """
    H, I = hidden_size, input_size
    k_rnn = 1.0 / jnp.sqrt(H)
    keys = jax.random.split(key, 10)

    def u(k, shape, bound):
        return jax.random.uniform(k, shape, jnp.float32, -bound, bound)

    w_ih0 = u(keys[0], (I, H), k_rnn)          # = weight_ih_l0.T
    w_hh0 = u(keys[1], (H, H), k_rnn)          # = weight_hh_l0.T
    b0 = u(keys[2], (1, H), k_rnn) + u(keys[3], (1, H), k_rnn)   # b_ih_l0 + b_hh_l0
    w_ih1 = u(keys[4], (H, H), k_rnn)          # = weight_ih_l1.T
    w_hh1 = u(keys[5], (H, H), k_rnn)          # = weight_hh_l1.T
    b1 = u(keys[6], (1, H), k_rnn) + u(keys[7], (1, H), k_rnn)   # b_ih_l1 + b_hh_l1

    k_fc = 1.0 / jnp.sqrt(H)
    w_fc = u(keys[8], (H, 1), k_fc)            # = fc.weight.T
    b_fc = u(keys[9], (1, 1), k_fc)            # = fc.bias

    return dict(w_ih0=w_ih0, w_hh0=w_hh0, b0=b0,
                w_ih1=w_ih1, w_hh1=w_hh1, b1=b1,
                w_fc=w_fc, b_fc=b_fc)


def simple_rnn_ref(x, params):
    """Pure-JAX f32 reference for correctness checking (eval-mode forward)."""
    B, T, I = x.shape
    H = params["w_hh0"].shape[0]
    h0 = jnp.zeros((B, H), jnp.float32)
    h1 = jnp.zeros((B, H), jnp.float32)
    for t in range(T):
        x_t = x[:, t, :]
        h0 = jnp.tanh(x_t @ params["w_ih0"] + h0 @ params["w_hh0"] + params["b0"])
        h1 = jnp.tanh(h0 @ params["w_ih1"] + h1 @ params["w_hh1"] + params["b1"])
    return jax.nn.sigmoid(h1 @ params["w_fc"] + params["b_fc"])


if __name__ == "__main__":
    B, T, I, H = 2, 8, 1, 64
    key = jax.random.PRNGKey(0)
    k_x, k_p = jax.random.split(key)

    x = jax.random.normal(k_x, (B, T, I), jnp.float32)
    params = make_params(k_p, input_size=I, hidden_size=H)
    kparams = pack_kernel_params(params)   # block-packed / bf16 weights, built once

    out = jax.block_until_ready(simple_rnn_model(x, kparams))
    ref = simple_rnn_ref(x, params)

    assert out.shape == (B, 1)
    # bf16 MXU operands inside the recurrence -> relaxed tolerance vs f32 reference.
    assert jnp.allclose(out, ref, atol=3e-2, rtol=1e-2), (out, ref)
    print("KERNEL_OK")
</pallas_src>

<mosaic_0001>
module attributes {stable_mosaic.version = 11 : i64} {
  func.func @rnn_wavefront_kernel(%arg0: memref<2x8x1xf32, #tpu.memory_space<vmem>>, %arg1: memref<1x64xf32, #tpu.memory_space<vmem>>, %arg2: memref<1x64xf32, #tpu.memory_space<vmem>>, %arg3: memref<128x128xbf16, #tpu.memory_space<vmem>>, %arg4: memref<1x64xf32, #tpu.memory_space<vmem>>, %arg5: memref<1x64xf32, #tpu.memory_space<vmem>>, %arg6: memref<1x1xf32, #tpu.memory_space<vmem>>, %arg7: memref<2x1xf32, #tpu.memory_space<vmem>>) attributes {dimension_semantics = [], scalar_prefetch = 0 : i64, scratch_operands = 0 : i64, tpu.core_type = #tpu.core_type<tc>} {
    %c0 = arith.constant 0 : index
    %c0_0 = arith.constant 0 : index
    %0 = vector.load %arg3[%c0, %c0_0] : memref<128x128xbf16, #tpu.memory_space<vmem>>, vector<128x128xbf16>
    %c0_1 = arith.constant 0 : index
    %c0_2 = arith.constant 0 : index
    %1 = vector.load %arg2[%c0_1, %c0_2] : memref<1x64xf32, #tpu.memory_space<vmem>>, vector<1x64xf32>
    %c0_3 = arith.constant 0 : index
    %c0_4 = arith.constant 0 : index
    %2 = vector.load %arg4[%c0_3, %c0_4] : memref<1x64xf32, #tpu.memory_space<vmem>>, vector<1x64xf32>
    %c0_5 = arith.constant 0 : index
    %c0_6 = arith.constant 0 : index
    %c0_7 = arith.constant 0 : index
    %3 = vector.load %arg0[%c0_5, %c0_6, %c0_7] : memref<2x8x1xf32, #tpu.memory_space<vmem>>, vector<2x8x1xf32>
    %c0_8 = arith.constant 0 : index
    %c0_9 = arith.constant 0 : index
    %4 = vector.load %arg1[%c0_8, %c0_9] : memref<1x64xf32, #tpu.memory_space<vmem>>, vector<1x64xf32>
    %5 = vector.shape_cast %4 : vector<1x64xf32> to vector<1x1x64xf32>
    %6 = vector.broadcast %3 : vector<2x8x1xf32> to vector<2x8x64xf32>
    %7 = vector.broadcast %5 : vector<1x1x64xf32> to vector<2x8x64xf32>
    %8 = arith.mulf %6, %7 : vector<2x8x64xf32>
    %9 = vector.shape_cast %1 : vector<1x64xf32> to vector<1x1x64xf32>
    %10 = vector.broadcast %9 : vector<1x1x64xf32> to vector<2x8x64xf32>
    %11 = arith.addf %8, %10 : vector<2x8x64xf32>
    %12 = vector.shape_cast %2 : vector<1x64xf32> to vector<1x1x64xf32>
    %13 = vector.broadcast %12 : vector<1x1x64xf32> to vector<2x8x64xf32>
    %14 = tpu.concatenate %11, %13 in 2 : vector<2x8x64xf32>, vector<2x8x64xf32> -> vector<2x8x128xf32>
    %15 = vector.extract_strided_slice %11 {offsets = [0, 0, 0], sizes = [2, 1, 64], strides = [1, 1, 1]} : vector<2x8x64xf32> to vector<2x1x64xf32>
    %16 = vector.shape_cast %15 : vector<2x1x64xf32> to vector<2x64xf32>
    %17 = math.tanh %16 : vector<2x64xf32>
    %cst = arith.constant 0.000000e+00 : f32
    %18 = vector.broadcast %cst : f32 to vector<2x64xf32>
    %19 = tpu.concatenate %17, %18 in 1 : vector<2x64xf32>, vector<2x64xf32> -> vector<2x128xf32>
    %20 = arith.truncf %19 : vector<2x128xf32> to vector<2x128xbf16>
    %cst_10 = arith.constant dense<0.000000e+00> : vector<2x128xf32>
    %21 = tpu.matmul %20, %0, %cst_10 {dimension_numbers = #tpu.dot_dimension_numbers<[1], [0], [0], [1], [0, 0, 1, 1], [], []>} : vector<2x128xbf16>, vector<128x128xbf16>, vector<2x128xf32> -> vector<2x128xf32>
    %22 = vector.extract_strided_slice %14 {offsets = [0, 1, 0], sizes = [2, 1, 128], strides = [1, 1, 1]} : vector<2x8x128xf32> to vector<2x1x128xf32>
    %23 = vector.shape_cast %22 : vector<2x1x128xf32> to vector<2x128xf32>
    %24 = arith.addf %23, %21 : vector<2x128xf32>
    %25 = math.tanh %24 : vector<2x128xf32>
    %26 = arith.truncf %25 : vector<2x128xf32> to vector<2x128xbf16>
    %cst_11 = arith.constant dense<0.000000e+00> : vector<2x128xf32>
    %27 = tpu.matmul %26, %0, %cst_11 {dimension_numbers = #tpu.dot_dimension_numbers<[1], [0], [0], [1], [0, 0, 1, 1], [], []>} : vector<2x128xbf16>, vector<128x128xbf16>, vector<2x128xf32> -> vector<2x128xf32>
    %28 = vector.extract_strided_slice %14 {offsets = [0, 2, 0], sizes = [2, 1, 128], strides = [1, 1, 1]} : vector<2x8x128xf32> to vector<2x1x128xf32>
    %29 = vector.shape_cast %28 : vector<2x1x128xf32> to vector<2x128xf32>
    %30 = arith.addf %29, %27 : vector<2x128xf32>
    %31 = math.tanh %30 : vector<2x128xf32>
    %32 = arith.truncf %31 : vector<2x128xf32> to vector<2x128xbf16>
    %cst_12 = arith.constant dense<0.000000e+00> : vector<2x128xf32>
    %33 = tpu.matmul %32, %0, %cst_12 {dimension_numbers = #tpu.dot_dimension_numbers<[1], [0], [0], [1], [0, 0, 1, 1], [], []>} : vector<2x128xbf16>, vector<128x128xbf16>, vector<2x128xf32> -> vector<2x128xf32>
    %34 = vector.extract_strided_slice %14 {offsets = [0, 3, 0], sizes = [2, 1, 128], strides = [1, 1, 1]} : vector<2x8x128xf32> to vector<2x1x128xf32>
    %35 = vector.shape_cast %34 : vector<2x1x128xf32> to vector<2x128xf32>
    %36 = arith.addf %35, %33 : vector<2x128xf32>
    %37 = math.tanh %36 : vector<2x128xf32>
    %38 = arith.truncf %37 : vector<2x128xf32> to vector<2x128xbf16>
    %cst_13 = arith.constant dense<0.000000e+00> : vector<2x128xf32>
    %39 = tpu.matmul %38, %0, %cst_13 {dimension_numbers = #tpu.dot_dimension_numbers<[1], [0], [0], [1], [0, 0, 1, 1], [], []>} : vector<2x128xbf16>, vector<128x128xbf16>, vector<2x128xf32> -> vector<2x128xf32>
    %40 = vector.extract_strided_slice %14 {offsets = [0, 4, 0], sizes = [2, 1, 128], strides = [1, 1, 1]} : vector<2x8x128xf32> to vector<2x1x128xf32>
    %41 = vector.shape_cast %40 : vector<2x1x128xf32> to vector<2x128xf32>
    %42 = arith.addf %41, %39 : vector<2x128xf32>
    %43 = math.tanh %42 : vector<2x128xf32>
    %44 = arith.truncf %43 : vector<2x128xf32> to vector<2x128xbf16>
    %cst_14 = arith.constant dense<0.000000e+00> : vector<2x128xf32>
    %45 = tpu.matmul %44, %0, %cst_14 {dimension_numbers = #tpu.dot_dimension_numbers<[1], [0], [0], [1], [0, 0, 1, 1], [], []>} : vector<2x128xbf16>, vector<128x128xbf16>, vector<2x128xf32> -> vector<2x128xf32>
    %46 = vector.extract_strided_slice %14 {offsets = [0, 5, 0], sizes = [2, 1, 128], strides = [1, 1, 1]} : vector<2x8x128xf32> to vector<2x1x128xf32>
    %47 = vector.shape_cast %46 : vector<2x1x128xf32> to vector<2x128xf32>
    %48 = arith.addf %47, %45 : vector<2x128xf32>
    %49 = math.tanh %48 : vector<2x128xf32>
    %50 = arith.truncf %49 : vector<2x128xf32> to vector<2x128xbf16>
    %cst_15 = arith.constant dense<0.000000e+00> : vector<2x128xf32>
    %51 = tpu.matmul %50, %0, %cst_15 {dimension_numbers = #tpu.dot_dimension_numbers<[1], [0], [0], [1], [0, 0, 1, 1], [], []>} : vector<2x128xbf16>, vector<128x128xbf16>, vector<2x128xf32> -> vector<2x128xf32>
    %52 = vector.extract_strided_slice %14 {offsets = [0, 6, 0], sizes = [2, 1, 128], strides = [1, 1, 1]} : vector<2x8x128xf32> to vector<2x1x128xf32>
    %53 = vector.shape_cast %52 : vector<2x1x128xf32> to vector<2x128xf32>
    %54 = arith.addf %53, %51 : vector<2x128xf32>
    %55 = math.tanh %54 : vector<2x128xf32>
    %56 = arith.truncf %55 : vector<2x128xf32> to vector<2x128xbf16>
    %cst_16 = arith.constant dense<0.000000e+00> : vector<2x128xf32>
    %57 = tpu.matmul %56, %0, %cst_16 {dimension_numbers = #tpu.dot_dimension_numbers<[1], [0], [0], [1], [0, 0, 1, 1], [], []>} : vector<2x128xbf16>, vector<128x128xbf16>, vector<2x128xf32> -> vector<2x128xf32>
    %58 = vector.extract_strided_slice %14 {offsets = [0, 7, 0], sizes = [2, 1, 128], strides = [1, 1, 1]} : vector<2x8x128xf32> to vector<2x1x128xf32>
    %59 = vector.shape_cast %58 : vector<2x1x128xf32> to vector<2x128xf32>
    %60 = arith.addf %59, %57 : vector<2x128xf32>
    %61 = math.tanh %60 : vector<2x128xf32>
    %62 = arith.truncf %61 : vector<2x128xf32> to vector<2x128xbf16>
    %cst_17 = arith.constant dense<0.000000e+00> : vector<2x128xf32>
    %63 = tpu.matmul %62, %0, %cst_17 {dimension_numbers = #tpu.dot_dimension_numbers<[1], [0], [0], [1], [0, 0, 1, 1], [], []>} : vector<2x128xbf16>, vector<128x128xbf16>, vector<2x128xf32> -> vector<2x128xf32>
    %64 = vector.extract_strided_slice %63 {offsets = [0, 64], sizes = [2, 64], strides = [1, 1]} : vector<2x128xf32> to vector<2x64xf32>
    %65 = vector.broadcast %2 : vector<1x64xf32> to vector<2x64xf32>
    %66 = arith.addf %64, %65 : vector<2x64xf32>
    %67 = math.tanh %66 : vector<2x64xf32>
    %c0_18 = arith.constant 0 : index
    %c0_19 = arith.constant 0 : index
    %68 = vector.load %arg5[%c0_18, %c0_19] : memref<1x64xf32, #tpu.memory_space<vmem>>, vector<1x64xf32>
    %69 = vector.broadcast %68 : vector<1x64xf32> to vector<2x64xf32>
    %70 = arith.mulf %67, %69 : vector<2x64xf32>
    %cst_20 = arith.constant dense<0.000000e+00> : vector<2xf32>
    %71 = vector.multi_reduction <add>, %70, %cst_20 [1] : vector<2x64xf32> to vector<2xf32>
    %72 = vector.shape_cast %71 : vector<2xf32> to vector<2x1xf32>
    %c0_21 = arith.constant 0 : index
    %c0_22 = arith.constant 0 : index
    %73 = vector.load %arg6[%c0_21, %c0_22] : memref<1x1xf32, #tpu.memory_space<vmem>>, vector<1x1xf32>
    %74 = vector.broadcast %73 : vector<1x1xf32> to vector<2x1xf32>
    %75 = arith.addf %72, %74 : vector<2x1xf32>
    %76 = arith.negf %75 : vector<2x1xf32>
    %77 = math.exp %76 : vector<2x1xf32>
    %cst_23 = arith.constant 1.000000e+00 : f32
    %78 = vector.broadcast %cst_23 : f32 to vector<2x1xf32>
    %79 = arith.addf %78, %77 : vector<2x1xf32>
    %80 = arith.divf %78, %79 : vector<2x1xf32>
    %c0_24 = arith.constant 0 : index
    %c0_25 = arith.constant 0 : index
    %81 = vector.load %arg7[%c0_24, %c0_25] : memref<2x1xf32, #tpu.memory_space<vmem>>, vector<2x1xf32>
    tpu.vector_store %arg7[%c0_24, %c0_25], %80 {strides = array<i32>} : memref<2x1xf32, #tpu.memory_space<vmem>>, vector<2x1xf32>,
    return
  }
}

</mosaic_0001>

<llo_original>
// kernel: tpu_custom_call.1
$region0: #{tpu_custom_call.1}
  #allocation0 [shape = 'u32[]', space=smem, size = 0x4, offset = 0x4, fixed_abs, tag = 'smem constant byte address 0x4 - core index']
  #allocation1 [shape = 'u32[144,128]{1,0:T(1,128)}', space=vmem, size = 0x12000, scoped, tag = 'internal scratch']
  #allocation2 [shape = 'f32[1,1]{1,0:T(1,128)S(1)}', space=vmem, size = 0x200, scoped, tag = 'scoped memory for tpu_custom_call.1']
  %s0 = inlined_call_operand.vmem [shape: f32[2,8,1], index: 0, kind: input, shape index: {}]
  %s1 = inlined_call_operand.vmem [shape: f32[1,64], index: 1, kind: input, shape index: {}]
  %s2 = inlined_call_operand.vmem [shape: f32[1,64], index: 2, kind: input, shape index: {}]
  %s3 = inlined_call_operand.hbm [shape: bf16[128,128], index: 3, kind: input, shape index: {}]
  %s4 = inlined_call_operand.vmem [shape: f32[1,64], index: 4, kind: input, shape index: {}]
  %s5 = inlined_call_operand.vmem [shape: f32[1,64], index: 5, kind: input, shape index: {}]
  %s6 = inlined_call_operand.<no memory space> [shape: f32[1,1], index: 6, kind: input, shape index: {}]
  %s7 = inlined_call_operand.vmem [shape: f32[2,1], index: 7, kind: output, shape index: {}]
  %s8 = sld [smem:[#allocation0]]
  $region42: #{tpu_custom_call.1} parent=0
    _
  %s10 = ssub.s32 1, %s8
  %s11 = scalar_select 0, %s10, %s8
  %v12 = vstv %s6
  %13 = vst [vmem:[#allocation2] sm:$0x1] %v12
  $region1: #{tpu_custom_call.1} parent=0
    #allocation3 [shape = 'u8[32768]{0}', space=vmem, size = 0x8000, scoped, tag = 'input window, operand 3, single buffered']
    #allocation4 [shape = 's32[1]{0}', space=sflag, size = 0x4, scoped, tag = 'scoped memory for tpu_custom_call.1']
    %14 = vsyncpa [#allocation4], 0
    // Predicated region
    $region2: #{tpu_custom_call.1} parent=1 // pred_check
      _
    $region3: #{tpu_custom_call.1} parent=1 // pred_check_branch
      %16 = sbr.rel (0) target = $region5
    $region4: #{tpu_custom_call.1} parent=1 // pred_region
      _
    $region5: #{tpu_custom_call.1} parent=1 // pred_fallthru
      _
    // Predicated region
    $region6: #{tpu_custom_call.1} parent=1 // pred_check
      _
    $region7: #{tpu_custom_call.1} parent=1 // pred_check_branch
      %18 = sbr.rel (0) target = $region9
    $region8: #{tpu_custom_call.1} parent=1 // pred_region
      _
    $region9: #{tpu_custom_call.1} parent=1 // pred_fallthru
      _
    // Predicated region
    $region10: #{tpu_custom_call.1} parent=1 // pred_check
      _
    $region11: #{tpu_custom_call.1} parent=1 // pred_check_branch
      %20 = sbr.rel (0) target = $region13
    $region12: #{tpu_custom_call.1} parent=1 // pred_region
      _
    $region13: #{tpu_custom_call.1} parent=1 // pred_fallthru
      _
    // Predicated region
    $region14: #{tpu_custom_call.1} parent=1 // pred_check
      _
    $region15: #{tpu_custom_call.1} parent=1 // pred_check_branch
      %22 = sbr.rel (0) target = $region17
    $region16: #{tpu_custom_call.1} parent=1 // pred_region
      %s24 = ssub.s32 1024, 1024
      %25 = vsyncadd [#allocation4], %s24
      %s26 = sshll.u32 [#allocation3], 4
      %s27 = int_to_ptr.vmem [resolvable:$true] %s26
      %32 = dma.hbm_to_vmem [thread:$0]  %s3, 1024, %s27, [#allocation4], 64, 64, 4
    $region17: #{tpu_custom_call.1} parent=1 // pred_fallthru
      _
    // Predicated region
    $region18: #{tpu_custom_call.1} parent=1 // pred_check
      _
    $region19: #{tpu_custom_call.1} parent=1 // pred_check_branch
      %34 = sbr.rel (0) target = $region21
    $region20: #{tpu_custom_call.1} parent=1 // pred_region
      _
    $region21: #{tpu_custom_call.1} parent=1 // pred_fallthru
      _
    // Predicated region
    $region22: #{tpu_custom_call.1} parent=1 // pred_check
      _
    $region23: #{tpu_custom_call.1} parent=1 // pred_check_branch
      %36 = sbr.rel (0) target = $region25
    $region24: #{tpu_custom_call.1} parent=1 // pred_region
      _
    $region25: #{tpu_custom_call.1} parent=1 // pred_fallthru
      _
    // Predicated region
    $region26: #{tpu_custom_call.1} parent=1 // pred_check
      _
    $region27: #{tpu_custom_call.1} parent=1 // pred_check_branch
      %38 = sbr.rel (0) target = $region29
    $region28: #{tpu_custom_call.1} parent=1 // pred_region
      _
    $region29: #{tpu_custom_call.1} parent=1 // pred_fallthru
      _
    // Predicated region
    $region30: #{tpu_custom_call.1} parent=1 // pred_check
      _
    $region31: #{tpu_custom_call.1} parent=1 // pred_check_branch
      %40 = sbr.rel (0) target = $region33
    $region32: #{tpu_custom_call.1} parent=1 // pred_region
      %41 = dma.done [#allocation4], 1024
    $region33: #{tpu_custom_call.1} parent=1 // pred_fallthru
      _
    %v43 = vld [vmem:[#allocation3] sm:$0xf]
    %v44 = vld [vmem:[#allocation3 + $0x4] sm:$0xf]
    %v45 = vld [vmem:[#allocation3 + $0x8] sm:$0xf]
    %v46 = vld [vmem:[#allocation3 + $0xc] sm:$0xf]
    %v47 = vld [vmem:[#allocation3 + $0x10] sm:$0xf]
    %v48 = vld [vmem:[#allocation3 + $0x14] sm:$0xf]
    %v49 = vld [vmem:[#allocation3 + $0x18] sm:$0xf]
    %v50 = vld [vmem:[#allocation3 + $0x1c] sm:$0xf]
    %v51 = vld [vmem:[#allocation3 + $0x20] sm:$0xf]
    %v52 = vld [vmem:[#allocation3 + $0x24] sm:$0xf]
    %v53 = vld [vmem:[#allocation3 + $0x28] sm:$0xf]
    %v54 = vld [vmem:[#allocation3 + $0x2c] sm:$0xf]
    %v55 = vld [vmem:[#allocation3 + $0x30] sm:$0xf]
    %v56 = vld [vmem:[#allocation3 + $0x34] sm:$0xf]
    %v57 = vld [vmem:[#allocation3 + $0x38] sm:$0xf]
    %v58 = vld [vmem:[#allocation3 + $0x3c] sm:$0xf]
    %v59 = vld [vmem:[%s2] sm:$0x1]
    %v60 = vld [vmem:[%s4] sm:$0x1]
    %v61 = vld [vmem:[%s0] sm:$0xff]
    %v62 = vld [vmem:[%s0 + $0x8] sm:$0xff]
    %v63 = vld [vmem:[%s1] sm:$0x1]
    %65 = vset.pattern.permute.xlu0 0
    %66 = vperm.xlu0 %65, %v61
    %v67 = vpop.permute.xlu0 %66
    %70 = vset.pattern.permute.xlu0 0
    %71 = vperm.xlu0 %70, %v62
    %v72 = vpop.permute.xlu0 %71
    %v75 = vlaneseq
    %v76 = vshrl.u32 %v75, 7
    %v77 = vsub.s32 0, %v76
    %v78 = vrot.slane %v63, %v77
    %v80 = vmul.f32 %v67, %v78
    %v81 = vmul.f32 %v72, %v78
    %v83 = vlaneseq
    %v84 = vshrl.u32 %v83, 7
    %v85 = vsub.s32 0, %v84
    %v86 = vrot.slane %v59, %v85
    %v88 = vadd.f32 %v80, %v86
    %v89 = vadd.f32 %v81, %v86
    %v91 = vlaneseq
    %v92 = vshrl.u32 %v91, 7
    %v93 = vsub.s32 0, %v92
    %v94 = vrot.slane %v60, %v93
    %95 = vrot.lane.b32.xlu0 %v94, 64
    %v96 = vpop.permute.xlu0 %95
    %vm98 = vcmask 523264
    %v99 = vsel %vm98, %v88, %v96
    %v100 = vsel %vm98, %v89, %v96
    %v101 = vtanh.pop %v88
    %v102 = vtanh.pop %v89
    %v105 = vrot.slane %v102, 7
    %vm106 = vcmask 1041409
    %v107 = vsel %vm106, %v105, %v101
    %v109 = vsel %vm98, %v107, 0.0
    %v110 = vpack.c.bf16 %v109, %v109
    %v127 = vunpack.c.l.b16 %v43
    %v128 = vunpack.c.l.b16 %v44
    %v129 = vunpack.c.l.b16 %v45
    %v130 = vunpack.c.l.b16 %v46
    %v131 = vunpack.c.l.b16 %v47
    %v132 = vunpack.c.l.b16 %v48
    %v133 = vunpack.c.l.b16 %v49
    %v134 = vunpack.c.l.b16 %v50
    %v135 = vunpack.c.l.b16 %v51
    %v136 = vunpack.c.l.b16 %v52
    %v137 = vunpack.c.l.b16 %v53
    %v138 = vunpack.c.l.b16 %v54
    %v139 = vunpack.c.l.b16 %v55
    %v140 = vunpack.c.l.b16 %v56
    %v141 = vunpack.c.l.b16 %v57
    %v142 = vunpack.c.l.b16 %v58
    %v143 = vpack.c.b16 %v128, %v127
    %v144 = vpack.c.b16 %v130, %v129
    %v145 = vpack.c.b16 %v132, %v131
    %v146 = vpack.c.b16 %v134, %v133
    %v147 = vpack.c.b16 %v136, %v135
    %v148 = vpack.c.b16 %v138, %v137
    %v149 = vpack.c.b16 %v140, %v139
    %v150 = vpack.c.b16 %v142, %v141
    %159 = vmatprep.subr.bf16.mxu0 0
    %160 = vmatpush1.bf16.msra.mxu0 %v150
    %161 = vmatprep.subr.bf16.mxu0 0
    %162 = vmatpush1.bf16.msra.mxu0 %v149
    %163 = vmatprep.subr.bf16.mxu0 0
    %164 = vmatpush1.bf16.msra.mxu0 %v148
    %165 = vmatprep.subr.bf16.mxu0 0
    %166 = vmatpush1.bf16.msra.mxu0 %v147
    %167 = vmatprep.subr.bf16.mxu0 0
    %168 = vmatpush1.bf16.msra.mxu0 %v146
    %169 = vmatprep.subr.bf16.mxu0 0
    %170 = vmatpush1.bf16.msra.mxu0 %v145
    %171 = vmatprep.subr.bf16.mxu0 0
    %172 = vmatpush1.bf16.msra.mxu0 %v144
    %173 = vmatprep.subr.bf16.mxu0 0
    %174 = vmatpush1.bf16.msra.mxu0 %v143
    %175 = vmatprep.subr.bf16.mxu0 0
    %176 = vmatpush2.bf16.msra.mxu0 0
    %177 = vmatprep.subr.bf16.mxu0 0
    %178 = vmatpush2.bf16.msra.mxu0 0
    %179 = vmatprep.subr.bf16.mxu0 0
    %180 = vmatpush2.bf16.msra.mxu0 0
    %181 = vmatprep.subr.bf16.mxu0 0
    %182 = vmatpush2.bf16.msra.mxu0 0
    %183 = vmatprep.subr.bf16.mxu0 0
    %184 = vmatpush2.bf16.msra.mxu0 0
    %185 = vmatprep.subr.bf16.mxu0 0
    %186 = vmatpush2.bf16.msra.mxu0 0
    %187 = vmatprep.subr.bf16.mxu0 0
    %188 = vmatpush2.bf16.msra.mxu0 0
    %189 = vmatprep.subr.bf16.mxu0 0
    %190 = vmatpush2.bf16.msra.mxu0 0
    %191 = vmatprep.mubr.bf16.mxu0 0
    %192 = vmatmul.mubr.bf16.gmra.mxu0 %v110
    %v193 = vpop.f32.mrf.mxu0
    %v194 = vadd.f32 0.0, %v193
    %v195 = vpop.f32.mrf.mxu0
    %v196 = vpop.f32.mrf.mxu0
    %v197 = vpop.f32.mrf.mxu0
    %198 = vdwg.mxu0
    %v200 = vrot.slane %v194, 7
    %v203 = vadd.f32 %v99, %v200
    %v204 = vadd.f32 %v100, %v194
    %v205 = vtanh.pop %v203
    %v206 = vtanh.pop %v204
    %v207 = vpack.c.bf16 %v205, %v205
    %v208 = vpack.c.bf16 %v206, %v206
    %v211 = vunpack.c.l.b16 %v207
    %v212 = vunpack.c.l.b16 %v208
    %v213 = vrot.slane %v211, 1
    %v214 = vsel %vm106, %v212, %v213
    %v215 = vpack.c.b16 %v214, %v214
    %217 = vmatprep.subr.bf16.mxu0 0
    %218 = vmatpush1.bf16.msra.mxu0 %v150
    %219 = vmatprep.subr.bf16.mxu0 0
    %220 = vmatpush1.bf16.msra.mxu0 %v149
    %221 = vmatprep.subr.bf16.mxu0 0
    %222 = vmatpush1.bf16.msra.mxu0 %v148
    %223 = vmatprep.subr.bf16.mxu0 0
    %224 = vmatpush1.bf16.msra.mxu0 %v147
    %225 = vmatprep.subr.bf16.mxu0 0
    %226 = vmatpush1.bf16.msra.mxu0 %v146
    %227 = vmatprep.subr.bf16.mxu0 0
    %228 = vmatpush1.bf16.msra.mxu0 %v145
    %229 = vmatprep.subr.bf16.mxu0 0
    %230 = vmatpush1.bf16.msra.mxu0 %v144
    %231 = vmatprep.subr.bf16.mxu0 0
    %232 = vmatpush1.bf16.msra.mxu0 %v143
    %233 = vmatprep.subr.bf16.mxu0 0
    %234 = vmatpush2.bf16.msra.mxu0 0
    %235 = vmatprep.subr.bf16.mxu0 0
    %236 = vmatpush2.bf16.msra.mxu0 0
    %237 = vmatprep.subr.bf16.mxu0 0
    %238 = vmatpush2.bf16.msra.mxu0 0
    %239 = vmatprep.subr.bf16.mxu0 0
    %240 = vmatpush2.bf16.msra.mxu0 0
    %241 = vmatprep.subr.bf16.mxu0 0
    %242 = vmatpush2.bf16.msra.mxu0 0
    %243 = vmatprep.subr.bf16.mxu0 0
    %244 = vmatpush2.bf16.msra.mxu0 0
    %245 = vmatprep.subr.bf16.mxu0 0
    %246 = vmatpush2.bf16.msra.mxu0 0
    %247 = vmatprep.subr.bf16.mxu0 0
    %248 = vmatpush2.bf16.msra.mxu0 0
    %249 = vmatprep.mubr.bf16.mxu0 0
    %250 = vmatmul.mubr.bf16.gmra.mxu0 %v215
    %v251 = vpop.f32.mrf.mxu0
    %v252 = vadd.f32 0.0, %v251
    %v253 = vpop.f32.mrf.mxu0
    %v254 = vpop.f32.mrf.mxu0
    %v255 = vpop.f32.mrf.mxu0
    %256 = vdwg.mxu0
    %v258 = vrot.slane %v252, 6
    %v259 = vrot.slane %v252, 7
    %v262 = vadd.f32 %v99, %v258
    %v263 = vadd.f32 %v100, %v259
    %v264 = vtanh.pop %v262
    %v265 = vtanh.pop %v263
    %v266 = vpack.c.bf16 %v264, %v264
    %v267 = vpack.c.bf16 %v265, %v265
    %v270 = vunpack.c.l.b16 %v266
    %v271 = vunpack.c.l.b16 %v267
    %v272 = vrot.slane %v270, 2
    %v273 = vrot.slane %v271, 1
    %v274 = vsel %vm106, %v273, %v272
    %v275 = vpack.c.b16 %v274, %v274
    %277 = vmatprep.subr.bf16.mxu0 0
    %278 = vmatpush1.bf16.msra.mxu0 %v150
    %279 = vmatprep.subr.bf16.mxu0 0
    %280 = vmatpush1.bf16.msra.mxu0 %v149
    %281 = vmatprep.subr.bf16.mxu0 0
    %282 = vmatpush1.bf16.msra.mxu0 %v148
    %283 = vmatprep.subr.bf16.mxu0 0
    %284 = vmatpush1.bf16.msra.mxu0 %v147
    %285 = vmatprep.subr.bf16.mxu0 0
    %286 = vmatpush1.bf16.msra.mxu0 %v146
    %287 = vmatprep.subr.bf16.mxu0 0
    %288 = vmatpush1.bf16.msra.mxu0 %v145
    %289 = vmatprep.subr.bf16.mxu0 0
    %290 = vmatpush1.bf16.msra.mxu0 %v144
    %291 = vmatprep.subr.bf16.mxu0 0
    %292 = vmatpush1.bf16.msra.mxu0 %v143
    %293 = vmatprep.subr.bf16.mxu0 0
    %294 = vmatpush2.bf16.msra.mxu0 0
    %295 = vmatprep.subr.bf16.mxu0 0
    %296 = vmatpush2.bf16.msra.mxu0 0
    %297 = vmatprep.subr.bf16.mxu0 0
    %298 = vmatpush2.bf16.msra.mxu0 0
    %299 = vmatprep.subr.bf16.mxu0 0
    %300 = vmatpush2.bf16.msra.mxu0 0
    %301 = vmatprep.subr.bf16.mxu0 0
    %302 = vmatpush2.bf16.msra.mxu0 0
    %303 = vmatprep.subr.bf16.mxu0 0
    %304 = vmatpush2.bf16.msra.mxu0 0
    %305 = vmatprep.subr.bf16.mxu0 0
    %306 = vmatpush2.bf16.msra.mxu0 0
    %307 = vmatprep.subr.bf16.mxu0 0
    %308 = vmatpush2.bf16.msra.mxu0 0
    %309 = vmatprep.mubr.bf16.mxu0 0
    %310 = vmatmul.mubr.bf16.gmra.mxu0 %v275
    %v311 = vpop.f32.mrf.mxu0
    %v312 = vadd.f32 0.0, %v311
    %v313 = vpop.f32.mrf.mxu0
    %v314 = vpop.f32.mrf.mxu0
    %v315 = vpop.f32.mrf.mxu0
    %316 = vdwg.mxu0
    %v318 = vrot.slane %v312, 5
    %v319 = vrot.slane %v312, 6
    %v322 = vadd.f32 %v99, %v318
    %v323 = vadd.f32 %v100, %v319
    %v324 = vtanh.pop %v322
    %v325 = vtanh.pop %v323
    %v326 = vpack.c.bf16 %v324, %v324
    %v327 = vpack.c.bf16 %v325, %v325
    %v330 = vunpack.c.l.b16 %v326
    %v331 = vunpack.c.l.b16 %v327
    %v332 = vrot.slane %v330, 3
    %v333 = vrot.slane %v331, 2
    %v334 = vsel %vm106, %v333, %v332
    %v335 = vpack.c.b16 %v334, %v334
    %337 = vmatprep.subr.bf16.mxu0 0
    %338 = vmatpush1.bf16.msra.mxu0 %v150
    %339 = vmatprep.subr.bf16.mxu0 0
    %340 = vmatpush1.bf16.msra.mxu0 %v149
    %341 = vmatprep.subr.bf16.mxu0 0
    %342 = vmatpush1.bf16.msra.mxu0 %v148
    %343 = vmatprep.subr.bf16.mxu0 0
    %344 = vmatpush1.bf16.msra.mxu0 %v147
    %345 = vmatprep.subr.bf16.mxu0 0
    %346 = vmatpush1.bf16.msra.mxu0 %v146
    %347 = vmatprep.subr.bf16.mxu0 0
    %348 = vmatpush1.bf16.msra.mxu0 %v145
    %349 = vmatprep.subr.bf16.mxu0 0
    %350 = vmatpush1.bf16.msra.mxu0 %v144
    %351 = vmatprep.subr.bf16.mxu0 0
    %352 = vmatpush1.bf16.msra.mxu0 %v143
    %353 = vmatprep.subr.bf16.mxu0 0
    %354 = vmatpush2.bf16.msra.mxu0 0
    %355 = vmatprep.subr.bf16.mxu0 0
    %356 = vmatpush2.bf16.msra.mxu0 0
    %357 = vmatprep.subr.bf16.mxu0 0
    %358 = vmatpush2.bf16.msra.mxu0 0
    %359 = vmatprep.subr.bf16.mxu0 0
    %360 = vmatpush2.bf16.msra.mxu0 0
    %361 = vmatprep.subr.bf16.mxu0 0
    %362 = vmatpush2.bf16.msra.mxu0 0
    %363 = vmatprep.subr.bf16.mxu0 0
    %364 = vmatpush2.bf16.msra.mxu0 0
    %365 = vmatprep.subr.bf16.mxu0 0
    %366 = vmatpush2.bf16.msra.mxu0 0
    %367 = vmatprep.subr.bf16.mxu0 0
    %368 = vmatpush2.bf16.msra.mxu0 0
    %369 = vmatprep.mubr.bf16.mxu0 0
    %370 = vmatmul.mubr.bf16.gmra.mxu0 %v335
    %v371 = vpop.f32.mrf.mxu0
    %v372 = vadd.f32 0.0, %v371
    %v373 = vpop.f32.mrf.mxu0
    %v374 = vpop.f32.mrf.mxu0
    %v375 = vpop.f32.mrf.mxu0
    %376 = vdwg.mxu0
    %v378 = vrot.slane %v372, 4
    %v379 = vrot.slane %v372, 5
    %v382 = vadd.f32 %v99, %v378
    %v383 = vadd.f32 %v100, %v379
    %v384 = vtanh.pop %v382
    %v385 = vtanh.pop %v383
    %v386 = vpack.c.bf16 %v384, %v384
    %v387 = vpack.c.bf16 %v385, %v385
    %v390 = vunpack.c.l.b16 %v386
    %v391 = vunpack.c.l.b16 %v387
    %v392 = vrot.slane %v390, 4
    %v393 = vrot.slane %v391, 3
    %v394 = vsel %vm106, %v393, %v392
    %v395 = vpack.c.b16 %v394, %v394
    %397 = vmatprep.subr.bf16.mxu0 0
    %398 = vmatpush1.bf16.msra.mxu0 %v150
    %399 = vmatprep.subr.bf16.mxu0 0
    %400 = vmatpush1.bf16.msra.mxu0 %v149
    %401 = vmatprep.subr.bf16.mxu0 0
    %402 = vmatpush1.bf16.msra.mxu0 %v148
    %403 = vmatprep.subr.bf16.mxu0 0
    %404 = vmatpush1.bf16.msra.mxu0 %v147
    %405 = vmatprep.subr.bf16.mxu0 0
    %406 = vmatpush1.bf16.msra.mxu0 %v146
    %407 = vmatprep.subr.bf16.mxu0 0
    %408 = vmatpush1.bf16.msra.mxu0 %v145
    %409 = vmatprep.subr.bf16.mxu0 0
    %410 = vmatpush1.bf16.msra.mxu0 %v144
    %411 = vmatprep.subr.bf16.mxu0 0
    %412 = vmatpush1.bf16.msra.mxu0 %v143
    %413 = vmatprep.subr.bf16.mxu0 0
    %414 = vmatpush2.bf16.msra.mxu0 0
    %415 = vmatprep.subr.bf16.mxu0 0
    %416 = vmatpush2.bf16.msra.mxu0 0
    %417 = vmatprep.subr.bf16.mxu0 0
    %418 = vmatpush2.bf16.msra.mxu0 0
    %419 = vmatprep.subr.bf16.mxu0 0
    %420 = vmatpush2.bf16.msra.mxu0 0
    %421 = vmatprep.subr.bf16.mxu0 0
    %422 = vmatpush2.bf16.msra.mxu0 0
    %423 = vmatprep.subr.bf16.mxu0 0
    %424 = vmatpush2.bf16.msra.mxu0 0
    %425 = vmatprep.subr.bf16.mxu0 0
    %426 = vmatpush2.bf16.msra.mxu0 0
    %427 = vmatprep.subr.bf16.mxu0 0
    %428 = vmatpush2.bf16.msra.mxu0 0
    %429 = vmatprep.mubr.bf16.mxu0 0
    %430 = vmatmul.mubr.bf16.gmra.mxu0 %v395
    %v431 = vpop.f32.mrf.mxu0
    %v432 = vadd.f32 0.0, %v431
    %v433 = vpop.f32.mrf.mxu0
    %v434 = vpop.f32.mrf.mxu0
    %v435 = vpop.f32.mrf.mxu0
    %436 = vdwg.mxu0
    %v438 = vrot.slane %v432, 3
    %v439 = vrot.slane %v432, 4
    %v442 = vadd.f32 %v99, %v438
    %v443 = vadd.f32 %v100, %v439
    %v444 = vtanh.pop %v442
    %v445 = vtanh.pop %v443
    %v446 = vpack.c.bf16 %v444, %v444
    %v447 = vpack.c.bf16 %v445, %v445
    %v450 = vunpack.c.l.b16 %v446
    %v451 = vunpack.c.l.b16 %v447
    %v452 = vrot.slane %v450, 5
    %v453 = vrot.slane %v451, 4
    %v454 = vsel %vm106, %v453, %v452
    %v455 = vpack.c.b16 %v454, %v454
    %457 = vmatprep.subr.bf16.mxu0 0
    %458 = vmatpush1.bf16.msra.mxu0 %v150
    %459 = vmatprep.subr.bf16.mxu0 0
    %460 = vmatpush1.bf16.msra.mxu0 %v149
    %461 = vmatprep.subr.bf16.mxu0 0
    %462 = vmatpush1.bf16.msra.mxu0 %v148
    %463 = vmatprep.subr.bf16.mxu0 0
    %464 = vmatpush1.bf16.msra.mxu0 %v147
    %465 = vmatprep.subr.bf16.mxu0 0
    %466 = vmatpush1.bf16.msra.mxu0 %v146
    %467 = vmatprep.subr.bf16.mxu0 0
    %468 = vmatpush1.bf16.msra.mxu0 %v145
    %469 = vmatprep.subr.bf16.mxu0 0
    %470 = vmatpush1.bf16.msra.mxu0 %v144
    %471 = vmatprep.subr.bf16.mxu0 0
    %472 = vmatpush1.bf16.msra.mxu0 %v143
    %473 = vmatprep.subr.bf16.mxu0 0
    %474 = vmatpush2.bf16.msra.mxu0 0
    %475 = vmatprep.subr.bf16.mxu0 0
    %476 = vmatpush2.bf16.msra.mxu0 0
    %477 = vmatprep.subr.bf16.mxu0 0
    %478 = vmatpush2.bf16.msra.mxu0 0
    %479 = vmatprep.subr.bf16.mxu0 0
    %480 = vmatpush2.bf16.msra.mxu0 0
    %481 = vmatprep.subr.bf16.mxu0 0
    %482 = vmatpush2.bf16.msra.mxu0 0
    %483 = vmatprep.subr.bf16.mxu0 0
    %484 = vmatpush2.bf16.msra.mxu0 0
    %485 = vmatprep.subr.bf16.mxu0 0
    %486 = vmatpush2.bf16.msra.mxu0 0
    %487 = vmatprep.subr.bf16.mxu0 0
    %488 = vmatpush2.bf16.msra.mxu0 0
    %489 = vmatprep.mubr.bf16.mxu0 0
    %490 = vmatmul.mubr.bf16.gmra.mxu0 %v455
    %v491 = vpop.f32.mrf.mxu0
    %v492 = vadd.f32 0.0, %v491
    %v493 = vpop.f32.mrf.mxu0
    %v494 = vpop.f32.mrf.mxu0
    %v495 = vpop.f32.mrf.mxu0
    %496 = vdwg.mxu0
    %v498 = vrot.slane %v492, 2
    %v499 = vrot.slane %v492, 3
    %v502 = vadd.f32 %v99, %v498
    %v503 = vadd.f32 %v100, %v499
    %v504 = vtanh.pop %v502
    %v505 = vtanh.pop %v503
    %v506 = vpack.c.bf16 %v504, %v504
    %v507 = vpack.c.bf16 %v505, %v505
    %v510 = vunpack.c.l.b16 %v506
    %v511 = vunpack.c.l.b16 %v507
    %v512 = vrot.slane %v510, 6
    %v513 = vrot.slane %v511, 5
    %v514 = vsel %vm106, %v513, %v512
    %v515 = vpack.c.b16 %v514, %v514
    %517 = vmatprep.subr.bf16.mxu0 0
    %518 = vmatpush1.bf16.msra.mxu0 %v150
    %519 = vmatprep.subr.bf16.mxu0 0
    %520 = vmatpush1.bf16.msra.mxu0 %v149
    %521 = vmatprep.subr.bf16.mxu0 0
    %522 = vmatpush1.bf16.msra.mxu0 %v148
    %523 = vmatprep.subr.bf16.mxu0 0
    %524 = vmatpush1.bf16.msra.mxu0 %v147
    %525 = vmatprep.subr.bf16.mxu0 0
    %526 = vmatpush1.bf16.msra.mxu0 %v146
    %527 = vmatprep.subr.bf16.mxu0 0
    %528 = vmatpush1.bf16.msra.mxu0 %v145
    %529 = vmatprep.subr.bf16.mxu0 0
    %530 = vmatpush1.bf16.msra.mxu0 %v144
    %531 = vmatprep.subr.bf16.mxu0 0
    %532 = vmatpush1.bf16.msra.mxu0 %v143
    %533 = vmatprep.subr.bf16.mxu0 0
    %534 = vmatpush2.bf16.msra.mxu0 0
    %535 = vmatprep.subr.bf16.mxu0 0
    %536 = vmatpush2.bf16.msra.mxu0 0
    %537 = vmatprep.subr.bf16.mxu0 0
    %538 = vmatpush2.bf16.msra.mxu0 0
    %539 = vmatprep.subr.bf16.mxu0 0
    %540 = vmatpush2.bf16.msra.mxu0 0
    %541 = vmatprep.subr.bf16.mxu0 0
    %542 = vmatpush2.bf16.msra.mxu0 0
    %543 = vmatprep.subr.bf16.mxu0 0
    %544 = vmatpush2.bf16.msra.mxu0 0
    %545 = vmatprep.subr.bf16.mxu0 0
    %546 = vmatpush2.bf16.msra.mxu0 0
    %547 = vmatprep.subr.bf16.mxu0 0
    %548 = vmatpush2.bf16.msra.mxu0 0
    %549 = vmatprep.mubr.bf16.mxu0 0
    %550 = vmatmul.mubr.bf16.gmra.mxu0 %v515
    %v551 = vpop.f32.mrf.mxu0
    %v552 = vadd.f32 0.0, %v551
    %v553 = vpop.f32.mrf.mxu0
    %v554 = vpop.f32.mrf.mxu0
    %v555 = vpop.f32.mrf.mxu0
    %556 = vdwg.mxu0
    %v558 = vrot.slane %v552, 1
    %v559 = vrot.slane %v552, 2
    %v562 = vadd.f32 %v99, %v558
    %v563 = vadd.f32 %v100, %v559
    %v564 = vtanh.pop %v562
    %v565 = vtanh.pop %v563
    %v566 = vpack.c.bf16 %v564, %v564
    %v567 = vpack.c.bf16 %v565, %v565
    %v570 = vunpack.c.l.b16 %v566
    %v571 = vunpack.c.l.b16 %v567
    %v572 = vrot.slane %v570, 7
    %v573 = vrot.slane %v571, 6
    %v574 = vsel %vm106, %v573, %v572
    %v575 = vpack.c.b16 %v574, %v574
    %577 = vmatprep.subr.bf16.mxu0 0
    %578 = vmatpush1.bf16.msra.mxu0 %v150
    %579 = vmatprep.subr.bf16.mxu0 0
    %580 = vmatpush1.bf16.msra.mxu0 %v149
    %581 = vmatprep.subr.bf16.mxu0 0
    %582 = vmatpush1.bf16.msra.mxu0 %v148
    %583 = vmatprep.subr.bf16.mxu0 0
    %584 = vmatpush1.bf16.msra.mxu0 %v147
    %585 = vmatprep.subr.bf16.mxu0 0
    %586 = vmatpush1.bf16.msra.mxu0 %v146
    %587 = vmatprep.subr.bf16.mxu0 0
    %588 = vmatpush1.bf16.msra.mxu0 %v145
    %589 = vmatprep.subr.bf16.mxu0 0
    %590 = vmatpush1.bf16.msra.mxu0 %v144
    %591 = vmatprep.subr.bf16.mxu0 0
    %592 = vmatpush1.bf16.msra.mxu0 %v143
    %593 = vmatprep.subr.bf16.mxu0 0
    %594 = vmatpush2.bf16.msra.mxu0 0
    %595 = vmatprep.subr.bf16.mxu0 0
    %596 = vmatpush2.bf16.msra.mxu0 0
    %597 = vmatprep.subr.bf16.mxu0 0
    %598 = vmatpush2.bf16.msra.mxu0 0
    %599 = vmatprep.subr.bf16.mxu0 0
    %600 = vmatpush2.bf16.msra.mxu0 0
    %601 = vmatprep.subr.bf16.mxu0 0
    %602 = vmatpush2.bf16.msra.mxu0 0
    %603 = vmatprep.subr.bf16.mxu0 0
    %604 = vmatpush2.bf16.msra.mxu0 0
    %605 = vmatprep.subr.bf16.mxu0 0
    %606 = vmatpush2.bf16.msra.mxu0 0
    %607 = vmatprep.subr.bf16.mxu0 0
    %608 = vmatpush2.bf16.msra.mxu0 0
    %609 = vmatprep.mubr.bf16.mxu0 0
    %610 = vmatmul.mubr.bf16.gmra.mxu0 %v575
    %v611 = vpop.f32.mrf.mxu0
    %v612 = vadd.f32 0.0, %v611
    %v613 = vpop.f32.mrf.mxu0
    %v614 = vpop.f32.mrf.mxu0
    %v615 = vpop.f32.mrf.mxu0
    %616 = vdwg.mxu0
    %v617 = vadd.f32 %v612, %v96
    %v618 = vtanh.pop %v617
    %v619 = vld [vmem:[%s5] sm:$0x1]
    %v621 = vlaneseq
    %v622 = vshrl.u32 %v621, 7
    %v623 = vsub.s32 0, %v622
    %v624 = vrot.slane %v619, %v623
    %625 = vrot.lane.b32.xlu0 %v624, 64
    %v626 = vpop.permute.xlu0 %625
    %v628 = vmul.f32 %v618, %v626
    %630 = vrot.lane.b32.xlu0 %v628, 64
    %v631 = vpop.permute.xlu0 %630
    %vm633 = vcmask 517120
    %v634 = vsel %vm633, %v631, 0.0
    %635 = vadd.xlane.f32.xlu0 %v634
    %v636 = vpop.xlane.xlu0 %635
    %v637 = vld [vmem:[#allocation2] sm:$0x1]
    %v639 = vlaneseq
    %v640 = vshrl.u32 %v639, 7
    %v641 = vsub.s32 0, %v640
    %v642 = vrot.slane %v637, %v641
    %v644 = vadd.f32 %v636, %v642
    %v645 = vxor.u32 %v644, 2147483648
    %v646 = vmul.f32 %v645, 1.442695
    %v647 = vpow.pop %v646
    %v648 = vadd.f32 %v647, 1.0
    %v649 = vrcp.pop %v648
    %v650 = vmul.f32 1.0, %v649
    %vm651 = vcmask 1024
    %652 = vst.msk [vmem:[%s7] sm:$0x3] %vm651, %v650
    // Predicated region
    $region34: #{tpu_custom_call.1} parent=1 // pred_check
      _
    $region35: #{tpu_custom_call.1} parent=1 // pred_check_branch
      %654 = sbr.rel (0) target = $region37
    $region36: #{tpu_custom_call.1} parent=1 // pred_region
      _
    $region37: #{tpu_custom_call.1} parent=1 // pred_fallthru
      _
    // Predicated region
    $region38: #{tpu_custom_call.1} parent=1 // pred_check
      _
    $region39: #{tpu_custom_call.1} parent=1 // pred_check_branch
      %656 = sbr.rel (0) target = $region41
    $region40: #{tpu_custom_call.1} parent=1 // pred_region
      _
    $region41: #{tpu_custom_call.1} parent=1 // pred_fallthru
      _
    %657 = vsyncpa [#allocation4], 1

</llo_original>
